<compile_context>
chip_gen: v5e
topology: v5e:2x2
jax: 0.10.0
libtpu: 0.0.40
codegen_flags: <defaults>
</compile_context>

<pallas_src>
import functools

import jax
import jax.numpy as jnp
from jax.experimental import pallas as pl
from jax.experimental.pallas import tpu as pltpu


def _ce_shift_kernel(tgt_ref, probs_ref, sum_ref, cnt_ref, *,
                     ignore_index, num_classes):
    """One (batch, time-tile) step of shifted cross-entropy.

    tgt_ref   : (TT, 1) int32   shifted targets (ignore_index in padded rows)
    probs_ref : (TT, C) float   probabilities, native dtype
    sum_ref   : (1, 1)  float32 per-batch running loss sum
    cnt_ref   : (1, 1)  float32 per-batch running valid-target count
    """
    t = pl.program_id(1)

    @pl.when(t == 0)
    def _():
        sum_ref[...] = jnp.zeros_like(sum_ref)
        cnt_ref[...] = jnp.zeros_like(cnt_ref)

    p = probs_ref[...]                                         # (TT, C) native dtype
    tgt = tgt_ref[...]                                         # (TT, 1) int32

    col = jax.lax.broadcasted_iota(jnp.int32, (1, num_classes), 1)  # (1, C)
    mask = col == tgt                                          # (TT, C) bool

    # logsumexp(log p) == log(sum p);  log(p)[tgt] == log(p[tgt]).
    # Select in the packed native dtype; accumulate the class sums in f32.
    s = jnp.sum(p, axis=-1, keepdims=True, dtype=jnp.float32)          # (TT, 1)
    p_tgt = jnp.sum(jnp.where(mask, p, 0), axis=-1, keepdims=True,
                    dtype=jnp.float32)                                 # (TT, 1)

    valid = tgt != ignore_index                                # (TT, 1) bool
    # Rows with ignore_index (padded / dropped-last-step / ragged-edge rows)
    # are discarded elementwise by the where(); any garbage in s/p_tgt there
    # (including NaN/Inf from out-of-bounds edge blocks) never propagates.
    # A "valid" target with p_tgt == 0 gives +inf (PyTorch would raise only
    # for out-of-range class ids; in-range zero-probability also gives inf).
    per_row = jnp.where(valid, jnp.log(s) - jnp.log(p_tgt), 0.0)

    sum_ref[...] += jnp.sum(per_row)
    cnt_ref[...] += jnp.sum(valid.astype(jnp.float32))


def ce_loss_shift(output, target, ignore_index=-1, *, vmem_block_bytes=None):
    """JAX/Pallas equivalent of CELossShift.forward(output, target).

    output : (N, T, C) probabilities (any float dtype; streamed in native dtype)
    target : (N, T)    integer class ids; ignore_index marks ignored positions
    Returns a scalar: mean NLL over non-ignored shifted targets.
    (All-ignored input gives 0/0 = NaN, matching PyTorch mean reduction.)
    """
    N, T, C = output.shape
    assert T >= 2, "need at least 2 time steps"
    Tm1 = T - 1
    # Mirrors the PyTorch shape requirement: CrossEntropyLoss would fail if the
    # [:, :249] cap actually truncated the targets but not the logits.
    assert Tm1 <= 249, "CELossShift: T-1 must be <= 249"

    itemsize = jnp.dtype(output.dtype).itemsize

    # Per-generation VMEM budget for one probs block (double-buffered by Pallas).
    try:
        vmem_cap = int(pltpu.get_tpu_info().vmem_capacity_bytes)
    except Exception:
        vmem_cap = 64 * 1024 * 1024            # conservative (v7x per-TC)
    if vmem_block_bytes is None:
        # ~1/10 of VMEM per block: ~6 MiB on v7x (64 MiB), ~13 MiB on v5e/v6e.
        vmem_block_bytes = min(28 * 1024 * 1024,
                               max(2 * 1024 * 1024, vmem_cap // 10))

    # Time tile: multiple of the dtype's sublane pack, capped at 256 rows
    # (T-1 <= 249, so one block usually covers the whole time extent).
    pack = max(8, 32 // itemsize)              # f32 -> 8, bf16 -> 16, int8 -> 32
    tt = (vmem_block_bytes // (C * itemsize)) // pack * pack
    tt = max(pack, min(tt, 256))
    if tt >= T:
        tt = T                                 # single full-extent time block
    num_t = pl.cdiv(Tm1, tt)
    t_pad = num_t * tt

    # Shifted targets (tiny array): tgt[n, t] = target[n, t + 1] for t < T-1,
    # padded with ignore_index so the dropped last logit row and any ragged
    # tile tail contribute nothing.  The big probability tensor is NOT copied.
    tgt = target[:, 1:].astype(jnp.int32)
    tgt = jnp.pad(tgt, ((0, 0), (0, t_pad - Tm1)), constant_values=ignore_index)
    tgt3d = tgt.reshape(N, t_pad, 1)

    # VMEM limit tied to the actual footprint:
    # 2x double-buffered probs block + in-kernel temporaries (mask + masked
    # select + conversion headroom) + target buffers + slack.
    block_bytes = tt * C * itemsize
    vmem_limit = 2 * block_bytes + 2 * tt * C * 4 + 8 * tt * 4 + (4 << 20)
    vmem_limit = int(min(max(vmem_limit, 32 << 20), (vmem_cap * 3) // 4))

    cost = pl.CostEstimate(
        flops=3 * N * t_pad * C,               # class sum + compare/select + masked sum
        transcendentals=2 * N * t_pad,         # two logs per row
        bytes_accessed=N * T * C * itemsize + N * t_pad * 4 + 2 * N * 4,
    )

    loss_sum, count = pl.pallas_call(
        functools.partial(_ce_shift_kernel,
                          ignore_index=ignore_index, num_classes=C),
        out_shape=(jax.ShapeDtypeStruct((N, 1, 1), jnp.float32),
                   jax.ShapeDtypeStruct((N, 1, 1), jnp.float32)),
        grid_spec=pltpu.PrefetchScalarGridSpec(
            num_scalar_prefetch=0,
            grid=(N, num_t),
            in_specs=[
                pl.BlockSpec((None, tt, 1), lambda n, t: (n, t, 0)),  # targets
                pl.BlockSpec((None, tt, C), lambda n, t: (n, t, 0)),  # probs
            ],
            out_specs=[
                pl.BlockSpec((None, 1, 1), lambda n, t: (n, 0, 0)),
                pl.BlockSpec((None, 1, 1), lambda n, t: (n, 0, 0)),
            ],
        ),
        compiler_params=pltpu.CompilerParams(
            dimension_semantics=("parallel", "arbitrary"),
            vmem_limit_bytes=vmem_limit,
        ),
        cost_estimate=cost,
    )(tgt3d, output)

    # Mean over non-ignored targets (matches nn.CrossEntropyLoss 'mean').
    return jnp.sum(loss_sum) / jnp.sum(count)


def _reference_ce_loss_shift(output, target, ignore_index=-1):
    """Pure-JAX reference mirroring the PyTorch module (original formulation)."""
    out = output[:, :-1, :]
    tgt = target[:, 1:][:, :249]
    C = out.shape[-1]
    logits = jnp.log(out.reshape(-1, C).astype(jnp.float32))
    tgt = tgt.reshape(-1).astype(jnp.int32)
    lse = jax.scipy.special.logsumexp(logits, axis=-1)
    picked = jnp.take_along_axis(
        logits, jnp.clip(tgt, 0, C - 1)[:, None], axis=-1)[:, 0]
    valid = tgt != ignore_index
    return jnp.sum(jnp.where(valid, lse - picked, 0.0)) / jnp.sum(valid)


if __name__ == "__main__":
    key = jax.random.PRNGKey(0)
    k1, k2 = jax.random.split(key)

    N, T, C = 2, 8, 32
    # output: probabilities over C (the module calls log() on them)
    logits_raw = jax.random.normal(k1, (N, T, C), dtype=jnp.float32)
    output = jax.nn.softmax(logits_raw, axis=-1)
    # target: class ids in [0, C); sprinkle a couple of ignore_index entries
    target = jax.random.randint(k2, (N, T), 0, C, dtype=jnp.int32)
    target = target.at[0, 3].set(-1).at[1, 6].set(-1)

    loss = ce_loss_shift(output, target, ignore_index=-1)
    loss = jax.block_until_ready(loss)

    ref = _reference_ce_loss_shift(output, target, ignore_index=-1)
    assert jnp.allclose(loss, ref, rtol=1e-5, atol=1e-5), (loss, ref)

    print("KERNEL_OK")
</pallas_src>

<mosaic_0001>
module attributes {stable_mosaic.version = 11 : i64} {
  func.func @_ce_shift_kernel(%arg0: i32, %arg1: i32, %arg2: memref<1x8x1xi32, #tpu.memory_space<vmem>>, %arg3: memref<1x8x32xf32, #tpu.memory_space<vmem>>, %arg4: memref<1x1x1xf32, #tpu.memory_space<vmem>>, %arg5: memref<1x1x1xf32, #tpu.memory_space<vmem>>) attributes {dimension_semantics = [#tpu.dimension_semantics<parallel>, #tpu.dimension_semantics<arbitrary>], iteration_bounds = array<i64: 2, 1>, scalar_prefetch = 0 : i64, scratch_operands = 0 : i64, tpu.core_type = #tpu.core_type<tc>, window_params = [{transform_indices = @transform_0, window_bounds = array<i64: 1, 8, 1>}, {transform_indices = @transform_1, window_bounds = array<i64: 1, 8, 32>}, {transform_indices = @transform_2, window_bounds = array<i64: 1, 1, 1>}, {transform_indices = @transform_3, window_bounds = array<i64: 1, 1, 1>}]} {
    %c0_i32 = arith.constant 0 : i32
    %0 = arith.cmpi eq, %arg1, %c0_i32 : i32
    %1 = arith.extui %0 : i1 to i32
    %c0_i32_0 = arith.constant 0 : i32
    %2 = arith.cmpi ne, %1, %c0_i32_0 : i32
    scf.if %2 {
      %cst_23 = arith.constant 0.000000e+00 : f32
      %49 = vector.broadcast %cst_23 : f32 to vector<1x1xf32>
      %c0_24 = arith.constant 0 : index
      %c0_25 = arith.constant 0 : index
      %c0_26 = arith.constant 0 : index
      %50 = vector.load %arg4[%c0_24, %c0_25, %c0_26] : memref<1x1x1xf32, #tpu.memory_space<vmem>>, vector<1x1x1xf32>
      %51 = vector.shape_cast %50 : vector<1x1x1xf32> to vector<1x1xf32>
      %52 = vector.shape_cast %49 : vector<1x1xf32> to vector<1x1x1xf32>
      tpu.vector_store %arg4[%c0_24, %c0_25, %c0_26], %52 {strides = array<i32>} : memref<1x1x1xf32, #tpu.memory_space<vmem>>, vector<1x1x1xf32>,
      %cst_27 = arith.constant 0.000000e+00 : f32
      %53 = vector.broadcast %cst_27 : f32 to vector<1x1xf32>
      %c0_28 = arith.constant 0 : index
      %c0_29 = arith.constant 0 : index
      %c0_30 = arith.constant 0 : index
      %54 = vector.load %arg5[%c0_28, %c0_29, %c0_30] : memref<1x1x1xf32, #tpu.memory_space<vmem>>, vector<1x1x1xf32>
      %55 = vector.shape_cast %54 : vector<1x1x1xf32> to vector<1x1xf32>
      %56 = vector.shape_cast %53 : vector<1x1xf32> to vector<1x1x1xf32>
      tpu.vector_store %arg5[%c0_28, %c0_29, %c0_30], %56 {strides = array<i32>} : memref<1x1x1xf32, #tpu.memory_space<vmem>>, vector<1x1x1xf32>,
    } else {
    }
    %c0 = arith.constant 0 : index
    %c0_1 = arith.constant 0 : index
    %c0_2 = arith.constant 0 : index
    %3 = vector.load %arg3[%c0, %c0_1, %c0_2] : memref<1x8x32xf32, #tpu.memory_space<vmem>>, vector<1x8x32xf32>
    %4 = vector.shape_cast %3 : vector<1x8x32xf32> to vector<8x32xf32>
    %c0_3 = arith.constant 0 : index
    %c0_4 = arith.constant 0 : index
    %c0_5 = arith.constant 0 : index
    %5 = vector.load %arg2[%c0_3, %c0_4, %c0_5] : memref<1x8x1xi32, #tpu.memory_space<vmem>>, vector<1x8x1xi32>
    %6 = vector.shape_cast %5 : vector<1x8x1xi32> to vector<8x1xi32>
    %7 = tpu.iota {dimensions = array<i32: 1>} : vector<1x32xi32>
    %8 = vector.broadcast %7 : vector<1x32xi32> to vector<8x32xi32>
    %9 = vector.broadcast %6 : vector<8x1xi32> to vector<8x32xi32>
    %10 = arith.cmpi eq, %8, %9 : vector<8x32xi32>
    %cst = arith.constant dense<0.000000e+00> : vector<8xf32>
    %11 = vector.multi_reduction <add>, %4, %cst [1] : vector<8x32xf32> to vector<8xf32>
    %12 = vector.shape_cast %11 : vector<8xf32> to vector<8x1xf32>
    %c0_i32_6 = arith.constant 0 : i32
    %13 = arith.sitofp %c0_i32_6 : i32 to f32
    %14 = vector.broadcast %13 : f32 to vector<8x32xf32>
    %15 = arith.select %10, %4, %14 : vector<8x32xi1>, vector<8x32xf32>
    %cst_7 = arith.constant dense<0.000000e+00> : vector<8xf32>
    %16 = vector.multi_reduction <add>, %15, %cst_7 [1] : vector<8x32xf32> to vector<8xf32>
    %17 = vector.shape_cast %16 : vector<8xf32> to vector<8x1xf32>
    %c-1_i32 = arith.constant -1 : i32
    %18 = vector.broadcast %c-1_i32 : i32 to vector<8x1xi32>
    %19 = arith.cmpi ne, %6, %18 : vector<8x1xi32>
    %20 = math.log %12 : vector<8x1xf32>
    %21 = math.log %17 : vector<8x1xf32>
    %22 = arith.subf %20, %21 : vector<8x1xf32>
    %cst_8 = arith.constant 0.000000e+00 : f32
    %23 = vector.broadcast %cst_8 : f32 to vector<8x1xf32>
    %24 = arith.select %19, %22, %23 : vector<8x1xi1>, vector<8x1xf32>
    %c0_9 = arith.constant 0 : index
    %c0_10 = arith.constant 0 : index
    %c0_11 = arith.constant 0 : index
    %25 = vector.load %arg4[%c0_9, %c0_10, %c0_11] : memref<1x1x1xf32, #tpu.memory_space<vmem>>, vector<1x1x1xf32>
    %26 = vector.shape_cast %25 : vector<1x1x1xf32> to vector<1x1xf32>
    %27 = vector.shape_cast %24 : vector<8x1xf32> to vector<1x8x1xf32>
    %cst_12 = arith.constant dense<0.000000e+00> : vector<1xf32>
    %28 = vector.multi_reduction <add>, %27, %cst_12 [1, 2] : vector<1x8x1xf32> to vector<1xf32>
    %29 = vector.shape_cast %28 : vector<1xf32> to vector<1x1x1xf32>
    %30 = vector.extract %29[0, 0, 0] : f32 from vector<1x1x1xf32>
    %31 = vector.broadcast %30 : f32 to vector<1x1xf32>
    %32 = arith.addf %26, %31 : vector<1x1xf32>
    %c0_13 = arith.constant 0 : index
    %c0_14 = arith.constant 0 : index
    %c0_15 = arith.constant 0 : index
    %33 = vector.load %arg4[%c0_13, %c0_14, %c0_15] : memref<1x1x1xf32, #tpu.memory_space<vmem>>, vector<1x1x1xf32>
    %34 = vector.shape_cast %33 : vector<1x1x1xf32> to vector<1x1xf32>
    %35 = vector.shape_cast %32 : vector<1x1xf32> to vector<1x1x1xf32>
    tpu.vector_store %arg4[%c0_13, %c0_14, %c0_15], %35 {strides = array<i32>} : memref<1x1x1xf32, #tpu.memory_space<vmem>>, vector<1x1x1xf32>,
    %c0_16 = arith.constant 0 : index
    %c0_17 = arith.constant 0 : index
    %c0_18 = arith.constant 0 : index
    %36 = vector.load %arg5[%c0_16, %c0_17, %c0_18] : memref<1x1x1xf32, #tpu.memory_space<vmem>>, vector<1x1x1xf32>
    %37 = vector.shape_cast %36 : vector<1x1x1xf32> to vector<1x1xf32>
    %38 = arith.extui %19 : vector<8x1xi1> to vector<8x1xi32>
    %39 = arith.sitofp %38 : vector<8x1xi32> to vector<8x1xf32>
    %40 = vector.shape_cast %39 : vector<8x1xf32> to vector<1x8x1xf32>
    %cst_19 = arith.constant dense<0.000000e+00> : vector<1xf32>
    %41 = vector.multi_reduction <add>, %40, %cst_19 [1, 2] : vector<1x8x1xf32> to vector<1xf32>
    %42 = vector.shape_cast %41 : vector<1xf32> to vector<1x1x1xf32>
    %43 = vector.extract %42[0, 0, 0] : f32 from vector<1x1x1xf32>
    %44 = vector.broadcast %43 : f32 to vector<1x1xf32>
    %45 = arith.addf %37, %44 : vector<1x1xf32>
    %c0_20 = arith.constant 0 : index
    %c0_21 = arith.constant 0 : index
    %c0_22 = arith.constant 0 : index
    %46 = vector.load %arg5[%c0_20, %c0_21, %c0_22] : memref<1x1x1xf32, #tpu.memory_space<vmem>>, vector<1x1x1xf32>
    %47 = vector.shape_cast %46 : vector<1x1x1xf32> to vector<1x1xf32>
    %48 = vector.shape_cast %45 : vector<1x1xf32> to vector<1x1x1xf32>
    tpu.vector_store %arg5[%c0_20, %c0_21, %c0_22], %48 {strides = array<i32>} : memref<1x1x1xf32, #tpu.memory_space<vmem>>, vector<1x1x1xf32>,
    return
  }
  func.func @transform_0(%arg0: i32, %arg1: i32) -> (i32, i32, i32) {
    %c0_i32 = arith.constant 0 : i32
    %c0_i32_0 = arith.constant 0 : i32
    return %arg0, %arg1, %c0_i32 : i32, i32, i32
  }
  func.func @transform_1(%arg0: i32, %arg1: i32) -> (i32, i32, i32) {
    %c0_i32 = arith.constant 0 : i32
    %c0_i32_0 = arith.constant 0 : i32
    return %arg0, %arg1, %c0_i32 : i32, i32, i32
  }
  func.func @transform_2(%arg0: i32, %arg1: i32) -> (i32, i32, i32) {
    %c0_i32 = arith.constant 0 : i32
    %c0_i32_0 = arith.constant 0 : i32
    %c0_i32_1 = arith.constant 0 : i32
    return %arg0, %c0_i32, %c0_i32_0 : i32, i32, i32
  }
  func.func @transform_3(%arg0: i32, %arg1: i32) -> (i32, i32, i32) {
    %c0_i32 = arith.constant 0 : i32
    %c0_i32_0 = arith.constant 0 : i32
    %c0_i32_1 = arith.constant 0 : i32
    return %arg0, %c0_i32, %c0_i32_0 : i32, i32, i32
  }
}

</mosaic_0001>

<llo_original>
// kernel: tpu_custom_call.1
$region0: #{tpu_custom_call.1}
  #allocation0 [shape = 'u32[]', space=smem, size = 0x4, offset = 0x4, fixed_abs, tag = 'smem constant byte address 0x4 - core index']
  #allocation1 [shape = 'u32[72,128]{1,0:T(1,128)}', space=vmem, size = 0x9000, scoped, tag = 'internal scratch']
  %s0 = inlined_call_operand.vmem [shape: s32[2,8,1], index: 0, kind: input, shape index: {}]
  %s1 = inlined_call_operand.vmem [shape: f32[2,8,32], index: 1, kind: input, shape index: {}]
  %s2 = inlined_call_operand.vmem [shape: f32[2,1,1], index: 2, kind: output, shape index: {0}]
  %s3 = inlined_call_operand.vmem [shape: f32[2,1,1], index: 3, kind: output, shape index: {1}]
  %4 = xla_tuple %s2, %s3
  %s5 = sld [smem:[#allocation0]]
  $region53: #{tpu_custom_call.1} parent=0
    _
  %s7 = ssub.s32 1, %s5
  %s8 = scalar_select 0, %s7, %s5
  loop: start=0, step=1, limit=4
  $region2: #{tpu_custom_call.1} parent=0 // loop_pre_header
    _
  $region3: #{tpu_custom_call.1} parent=0 // loop_header
    %s10 = sphi 0, %s14
    %p11 = scmp.ge.s32.totalorder %s10, 4
    %s17 = sphi 0, %s29
    %s18 = sphi 0, %s25
    %s19 = sphi 0, %s17
    %s20 = sphi 0, %s18
    %s21 = sphi 0, %s19
    %s22 = sphi 0, %s20
    %s34 = sphi 0, %s36
    %s37 = sphi 0, %s34
    %s38 = sphi 0, %s37
    %s54 = sphi 0, %s38
    %s62 = sphi 0, %s64
    %s65 = sphi 0, %s62
    %s66 = sphi 0, %s65
    %s82 = sphi 0, %s66
    %s88 = sphi 0, %s90
    %s91 = sphi 0, %s88
    %s92 = sphi 0, %s91
    %s108 = sphi 0, %s92
    %s114 = sphi 0, %s116
    %s117 = sphi 0, %s114
    %s118 = sphi 0, %s117
    %s134 = sphi 0, %s118
  $region4: #{tpu_custom_call.1} parent=0 // loop_header_branch
    %13 = sbr.rel (%p11) target = $region8
  $region5: #{tpu_custom_call.1} parent=0 // loop_body
    %s15 = ssub.s32 %s10, 1
    %s16 = ssub.s32 %s10, 2
    %s23 = sadd.s32 1, %s18
    %p24 = scmp.ge.s32.totalorder %s23, 1
    %s25 = scalar_select %p24, 0, %s23
    %s26 = sadd.s32 1, %s17
    %s27 = scalar_select %p24, %s26, %s17
    %p28 = scmp.ge.s32.totalorder %s27, 2
    %s29 = scalar_select %p28, 0, %s27
    %s30 = ssub.s32 %s17, %s29
    %s31 = ssub.s32 %s18, %s25
    %s32 = sor.u32 %s30, %s31
    %p33 = scmp.eq.s32.totalorder %s32, 0
    %s35 = sadd.s32 %s34, 1
    %s36 = scalar_select %p33, %s34, %s35
    %p39 = pneg %p33
    %p40 = scmp.eq.s32.totalorder %s10, 1
    %p41 = por %p39, %p40
    %p42 = scmp.ne.s32.totalorder %s34, %s37
    %p43 = scmp.eq.s32.totalorder %s10, 0
    %p44 = por %p42, %p43
    %p45 = scmp.ne.s32.totalorder %s34, %s37
    %p46 = scmp.eq.s32.totalorder %s15, 1
    %p47 = por %p45, %p46
    %p48 = scmp.ne.s32.totalorder %s37, %s38
    %p49 = scmp.eq.s32.totalorder %s15, 0
    %p50 = por %p48, %p49
    %p51 = scmp.ne.s32.totalorder %s37, %s38
    %p52 = scmp.eq.s32.totalorder %s16, 1
    %p53 = por %p51, %p52
    %p55 = scmp.ne.s32.totalorder %s38, %s54
    %p56 = scmp.eq.s32.totalorder %s16, 0
    %p57 = por %p55, %p56
    %s58 = ssub.s32 %s17, %s29
    %s59 = ssub.s32 %s18, %s25
    %s60 = sor.u32 %s58, %s59
    %p61 = scmp.eq.s32.totalorder %s60, 0
    %s63 = sadd.s32 %s62, 1
    %s64 = scalar_select %p61, %s62, %s63
    %p67 = pneg %p61
    %p68 = scmp.eq.s32.totalorder %s10, 1
    %p69 = por %p67, %p68
    %p70 = scmp.ne.s32.totalorder %s62, %s65
    %p71 = scmp.eq.s32.totalorder %s10, 0
    %p72 = por %p70, %p71
    %p73 = scmp.ne.s32.totalorder %s62, %s65
    %p74 = scmp.eq.s32.totalorder %s15, 1
    %p75 = por %p73, %p74
    %p76 = scmp.ne.s32.totalorder %s65, %s66
    %p77 = scmp.eq.s32.totalorder %s15, 0
    %p78 = por %p76, %p77
    %p79 = scmp.ne.s32.totalorder %s65, %s66
    %p80 = scmp.eq.s32.totalorder %s16, 1
    %p81 = por %p79, %p80
    %p83 = scmp.ne.s32.totalorder %s66, %s82
    %p84 = scmp.eq.s32.totalorder %s16, 0
    %p85 = por %p83, %p84
    %s86 = ssub.s32 %s17, %s29
    %p87 = scmp.eq.s32.totalorder %s86, 0
    %s89 = sadd.s32 %s88, 1
    %s90 = scalar_select %p87, %s88, %s89
    %p93 = pneg %p87
    %p94 = scmp.eq.s32.totalorder %s10, 1
    %p95 = por %p93, %p94
    %p96 = scmp.ne.s32.totalorder %s88, %s91
    %p97 = scmp.eq.s32.totalorder %s10, 0
    %p98 = por %p96, %p97
    %p99 = scmp.ne.s32.totalorder %s88, %s91
    %p100 = scmp.eq.s32.totalorder %s15, 1
    %p101 = por %p99, %p100
    %p102 = scmp.ne.s32.totalorder %s91, %s92
    %p103 = scmp.eq.s32.totalorder %s15, 0
    %p104 = por %p102, %p103
    %p105 = scmp.ne.s32.totalorder %s91, %s92
    %p106 = scmp.eq.s32.totalorder %s16, 1
    %p107 = por %p105, %p106
    %p109 = scmp.ne.s32.totalorder %s92, %s108
    %p110 = scmp.eq.s32.totalorder %s16, 0
    %p111 = por %p109, %p110
    %s112 = ssub.s32 %s17, %s29
    %p113 = scmp.eq.s32.totalorder %s112, 0
    %s115 = sadd.s32 %s114, 1
    %s116 = scalar_select %p113, %s114, %s115
    %p119 = pneg %p113
    %p120 = scmp.eq.s32.totalorder %s10, 1
    %p121 = por %p119, %p120
    %p122 = scmp.ne.s32.totalorder %s114, %s117
    %p123 = scmp.eq.s32.totalorder %s10, 0
    %p124 = por %p122, %p123
    %p125 = scmp.ne.s32.totalorder %s114, %s117
    %p126 = scmp.eq.s32.totalorder %s15, 1
    %p127 = por %p125, %p126
    %p128 = scmp.ne.s32.totalorder %s117, %s118
    %p129 = scmp.eq.s32.totalorder %s15, 0
    %p130 = por %p128, %p129
    %p131 = scmp.ne.s32.totalorder %s117, %s118
    %p132 = scmp.eq.s32.totalorder %s16, 1
    %p133 = por %p131, %p132
    %p135 = scmp.ne.s32.totalorder %s118, %s134
    %p136 = scmp.eq.s32.totalorder %s16, 0
    %p137 = por %p135, %p136
    %p138 = scmp.le.s32.totalorder 1, %s10
    %p139 = scmp.lt.s32.totalorder %s10, 3
    %p140 = pnand %p138, %p139
    %p141 = pneg %p140
    // Predicated region
    $region9: #{tpu_custom_call.1} parent=5 // pred_check
      _
    $region10: #{tpu_custom_call.1} parent=5 // pred_check_branch
      %143 = sbr.rel (%p140) target = $region12
    $region11: #{tpu_custom_call.1} parent=5 // pred_region
      %s144 = ssub.s32 %s10, 1
    $region12: #{tpu_custom_call.1} parent=5 // pred_fallthru
      _
    %p145 = scmp.lt.s32.totalorder %s10, 2
    // Predicated region
    $region13: #{tpu_custom_call.1} parent=5 // pred_check
      %p146 = pneg %p145
    $region14: #{tpu_custom_call.1} parent=5 // pred_check_branch
      %148 = sbr.rel (%p146) target = $region16
    $region15: #{tpu_custom_call.1} parent=5 // pred_region
      // Predicated region
      $region17: #{tpu_custom_call.1} parent=15 // pred_check
        %p149 = pneg %p44
      $region18: #{tpu_custom_call.1} parent=15 // pred_check_branch
        %151 = sbr.rel (%p149) target = $region20
      $region19: #{tpu_custom_call.1} parent=15 // pred_region
        %p152 = scmp.lt.s32.totalorder %s17, 1
        %s153 = scalar_select %p152, %s17, 1
        %p154 = scmp.lt.s32.totalorder %s18, 0
        %s155 = scalar_select %p154, %s18, 0
        %s156 = sadd.s32 %s155, %s153
        %s157 = smul.addr %s156, 8
        %s158 = scalar_lea.vmem %s0, %s157
      $region20: #{tpu_custom_call.1} parent=15 // pred_fallthru
        _
      // Predicated region
      $region21: #{tpu_custom_call.1} parent=15 // pred_check
        %p159 = pneg %p72
      $region22: #{tpu_custom_call.1} parent=15 // pred_check_branch
        %161 = sbr.rel (%p159) target = $region24
      $region23: #{tpu_custom_call.1} parent=15 // pred_region
        %p162 = scmp.lt.s32.totalorder %s17, 1
        %s163 = scalar_select %p162, %s17, 1
        %p164 = scmp.lt.s32.totalorder %s18, 0
        %s165 = scalar_select %p164, %s18, 0
        %s166 = sadd.s32 %s165, %s163
        %s167 = smul.addr %s166, 8
        %s168 = scalar_lea.vmem %s1, %s167
      $region24: #{tpu_custom_call.1} parent=15 // pred_fallthru
        _
    $region16: #{tpu_custom_call.1} parent=5 // pred_fallthru
      _
    %p169 = scmp.le.s32.totalorder 1, %s10
    %p170 = scmp.lt.s32.totalorder %s10, 3
    %p171 = pnand %p169, %p170
    %p172 = pneg %p171
    // Predicated region
    $region25: #{tpu_custom_call.1} parent=5 // pred_check
      _
    $region26: #{tpu_custom_call.1} parent=5 // pred_check_branch
      %174 = sbr.rel (%p171) target = $region28
    $region27: #{tpu_custom_call.1} parent=5 // pred_region
      %s175 = ssub.s32 %s10, 1
      %p176 = scmp.lt.s32.totalorder %s19, 1
      %s177 = scalar_select %p176, %s19, 1
      %p178 = scmp.lt.s32.totalorder %s20, 0
      %s179 = scalar_select %p178, %s20, 0
      %s180 = sadd.s32 %s179, %s177
      %s181 = smul.addr %s180, 8
      %s182 = scalar_lea.vmem %s0, %s181
      %p183 = pneg %p50
      %p184 = pneg %p47
      %p185 = scmp.lt.s32.totalorder %s19, 1
      %s186 = scalar_select %p185, %s19, 1
      %p187 = scmp.lt.s32.totalorder %s20, 0
      %s188 = scalar_select %p187, %s20, 0
      %s189 = sadd.s32 %s188, %s186
      %s190 = smul.addr %s189, 8
      %s191 = scalar_lea.vmem %s1, %s190
      %p192 = pneg %p78
      %p193 = pneg %p75
      %p194 = pneg %p104
      %p195 = pneg %p101
      %p196 = scmp.lt.s32.totalorder %s19, 1
      %s197 = scalar_select %p196, %s19, 1
      %s198 = scalar_lea.vmem %s2, %s197
      %p199 = pneg %p130
      %p200 = pneg %p127
      %p201 = scmp.lt.s32.totalorder %s19, 1
      %s202 = scalar_select %p201, %s19, 1
      %s203 = scalar_lea.vmem %s3, %s202
      %p204 = scmp.lt.s32.totalorder %s19, 1
      %s205 = scalar_select %p204, %s19, 1
      %p206 = scmp.lt.s32.totalorder %s20, 0
      %s207 = scalar_select %p206, %s20, 0
      %s208 = sadd.s32 %s207, %s205
      %s209 = smul.addr %s208, 8
      %s210 = scalar_lea.vmem %s0, %s209
      %p211 = scmp.lt.s32.totalorder %s19, 1
      %s212 = scalar_select %p211, %s19, 1
      %p213 = scmp.lt.s32.totalorder %s20, 0
      %s214 = scalar_select %p213, %s20, 0
      %s215 = sadd.s32 %s214, %s212
      %s216 = smul.addr %s215, 8
      %s217 = scalar_lea.vmem %s1, %s216
      %p218 = scmp.lt.s32.totalorder %s19, 1
      %s219 = scalar_select %p218, %s19, 1
      %s220 = scalar_lea.vmem %s2, %s219
      %p221 = scmp.lt.s32.totalorder %s19, 1
      %s222 = scalar_select %p221, %s19, 1
      %s223 = scalar_lea.vmem %s3, %s222
      %p224 = scmp.eq.s32.totalorder %s20, 0
      // Predicated region
      $region29: #{tpu_custom_call.1} parent=27 // pred_check
        %p225 = pneg %p224
      $region30: #{tpu_custom_call.1} parent=27 // pred_check_branch
        %227 = sbr.rel (%p225) target = $region32
      $region31: #{tpu_custom_call.1} parent=27 // pred_region
        %vm228 = vcmask 0
        %229 = vst.msk [vmem:[%s220] sm:$0x1] %vm228, 0.0
        %230 = vst.msk [vmem:[%s223] sm:$0x1] %vm228, 0.0
      $region32: #{tpu_custom_call.1} parent=27 // pred_fallthru
        _
      %v231 = vld [vmem:[%s217] sm:$0xff]
      %v232 = vld [vmem:[%s210] sm:$0xff]
      %v233 = vlaneseq
      %v234 = vand.u32 %v233, 127
      %235 = vset.pattern.permute.xlu0 0
      %236 = vperm.xlu0 %235, %v232
      %v237 = vpop.permute.xlu0 %236
      %vm238 = vcmp.eq.s32.totalorder %v234, %v237
      %vm239 = vcmask 261120
      %v240 = vsel %vm239, %v231, 0.0
      %241 = vadd.xlane.f32.xlu0 %v240
      %v242 = vpop.xlane.xlu0 %241
      %v243 = vsel %vm238, %v231, 0.0
      %v244 = vsel %vm239, %v243, 0.0
      %245 = vadd.xlane.f32.xlu0 %v244
      %v246 = vpop.xlane.xlu0 %245
      %vm247 = vcmp.ne.s32.totalorder %v232, 4294967295
      %v248 = vlog2.pop %v242
      %v249 = vmul.f32 %v248, 0.6931472
      %v250 = vlog2.pop %v246
      %v251 = vmul.f32 %v250, 0.6931472
      %v252 = vsub.f32 %v249, %v251
      %v253 = vsel %vm247, %v252, 0.0
      %v254 = vld [vmem:[%s220] sm:$0x1]
      %vm255 = vcmask 7168
      %v256 = vsel %vm255, %v253, 0.0
      %257 = vadd.xlane.f32.xlu0 %v256
      %v258 = vpop.xlane.xlu0 %257
      %v259 = vrot.slane %v258, 4
      %v260 = vadd.f32 %v258, %v259
      %v261 = vrot.slane %v260, 2
      %v262 = vadd.f32 %v260, %v261
      %v263 = vrot.slane %v262, 1
      %v264 = vadd.f32 %v262, %v263
      %s265 = vtos %v264
      %v266 = vstv %s265
      %v267 = vadd.f32 %v254, %v266
      %vm268 = vcmask 0
      %269 = vst.msk [vmem:[%s220] sm:$0x1] %vm268, %v267
      %v270 = vld [vmem:[%s223] sm:$0x1]
      %v271 = vsel %vm247, 1, 0
      %v272 = vcvt.s32.f32 %v271
      %v273 = vsel %vm255, %v272, 0.0
      %274 = vadd.xlane.f32.xlu0 %v273
      %v275 = vpop.xlane.xlu0 %274
      %v276 = vrot.slane %v275, 4
      %v277 = vadd.f32 %v275, %v276
      %v278 = vrot.slane %v277, 2
      %v279 = vadd.f32 %v277, %v278
      %v280 = vrot.slane %v279, 1
      %v281 = vadd.f32 %v279, %v280
      %s282 = vtos %v281
      %v283 = vstv %s282
      %v284 = vadd.f32 %v270, %v283
      %285 = vst.msk [vmem:[%s223] sm:$0x1] %vm268, %v284
      %p286 = scmp.lt.s32.totalorder %s19, 1
      %s287 = scalar_select %p286, %s19, 1
      %s288 = scalar_lea.vmem %s2, %s287
      %p289 = scmp.lt.s32.totalorder %s19, 1
      %s290 = scalar_select %p289, %s19, 1
      %s291 = scalar_lea.vmem %s3, %s290
      // Predicated region
      $region33: #{tpu_custom_call.1} parent=27 // pred_check
        %p292 = pneg %p101
      $region34: #{tpu_custom_call.1} parent=27 // pred_check_branch
        %294 = sbr.rel (%p292) target = $region36
      $region35: #{tpu_custom_call.1} parent=27 // pred_region
        _
      $region36: #{tpu_custom_call.1} parent=27 // pred_fallthru
        _
      // Predicated region
      $region37: #{tpu_custom_call.1} parent=27 // pred_check
        %p295 = pneg %p127
      $region38: #{tpu_custom_call.1} parent=27 // pred_check_branch
        %297 = sbr.rel (%p295) target = $region40
      $region39: #{tpu_custom_call.1} parent=27 // pred_region
        _
      $region40: #{tpu_custom_call.1} parent=27 // pred_fallthru
        _
    $region28: #{tpu_custom_call.1} parent=5 // pred_fallthru
      _
    %p298 = scmp.le.s32.totalorder 2, %s10
    // Predicated region
    $region41: #{tpu_custom_call.1} parent=5 // pred_check
      %p299 = pneg %p298
    $region42: #{tpu_custom_call.1} parent=5 // pred_check_branch
      %301 = sbr.rel (%p299) target = $region44
    $region43: #{tpu_custom_call.1} parent=5 // pred_region
      %s302 = ssub.s32 %s10, 2
      // Predicated region
      $region45: #{tpu_custom_call.1} parent=43 // pred_check
        %p303 = pneg %p107
      $region46: #{tpu_custom_call.1} parent=43 // pred_check_branch
        %305 = sbr.rel (%p303) target = $region48
      $region47: #{tpu_custom_call.1} parent=43 // pred_region
        %p306 = scmp.lt.s32.totalorder %s21, 1
        %s307 = scalar_select %p306, %s21, 1
        %s308 = scalar_lea.vmem %s2, %s307
      $region48: #{tpu_custom_call.1} parent=43 // pred_fallthru
        _
      // Predicated region
      $region49: #{tpu_custom_call.1} parent=43 // pred_check
        %p309 = pneg %p133
      $region50: #{tpu_custom_call.1} parent=43 // pred_check_branch
        %311 = sbr.rel (%p309) target = $region52
      $region51: #{tpu_custom_call.1} parent=43 // pred_region
        %p312 = scmp.lt.s32.totalorder %s21, 1
        %s313 = scalar_select %p312, %s21, 1
        %s314 = scalar_lea.vmem %s3, %s313
      $region52: #{tpu_custom_call.1} parent=43 // pred_fallthru
        _
    $region44: #{tpu_custom_call.1} parent=5 // pred_fallthru
      _
  $region6: #{tpu_custom_call.1} parent=0 // loop_footer
    %s14 = sadd.s32 1, %s10
  $region7: #{tpu_custom_call.1} parent=0 // loop_footer_branch
    %9 = sbr.rel target = $region3
  $region8: #{tpu_custom_call.1} parent=0 // loop_exit
    _

</llo_original>
